<compile_context>
chip_gen: v5e
topology: v5e:2x2
jax: 0.10.0
libtpu: 0.0.40
codegen_flags: <defaults>
</compile_context>

<pallas_src>
import jax
import jax.numpy as jnp
import numpy as np
from jax import lax
from jax.experimental import pallas as pl
from jax.experimental.pallas import tpu as pltpu

_LANES = 128
_VMEM_LIMIT = 48 * 1024 * 1024    # scoped-VMEM cap; safe on v7x's 64 MiB part
_VMEM_BUDGET = 36 * 1024 * 1024   # what the double-buffered tiles may use


# ---------------------------------------------------------------- kernels ---

def _make_conv_kernel(precision):
    def kernel(a_ref, w_ref, b_ref, o_ref):
        # a: [tm, 9C] im2col tile; w: [Nj, 9C, tn] VMEM-resident weights
        # (DMA'd once); b: [1, tn] f32 bias; o: [tm, tn] in the output dtype.
        j = pl.program_id(1)
        acc = jnp.dot(a_ref[...], w_ref[j],
                      precision=precision,
                      preferred_element_type=jnp.float32)
        o_ref[...] = (acc + b_ref[...]).astype(o_ref.dtype)
    return kernel


def _avgpool_kernel(x_ref, p_ref, o_ref):
    # x: [tm, g*2W] packed row pairs; p: [g*2W, g*Wo] block-diag pooling matrix
    # (0.25 folded in).  Pool in f32 regardless of the input dtype.
    s = x_ref[...].astype(jnp.float32)
    o_ref[...] = jnp.dot(s, p_ref[...],
                         precision=lax.Precision.HIGHEST,
                         preferred_element_type=jnp.float32).astype(o_ref.dtype)


# --------------------------------------------------------------- wrappers ---

def conv_downsample(x, weight, bias, *, tm=512, compute_dtype=None):
    """x: [N,C,H,W]; weight: [Cout,Cin,3,3]; bias: [Cout] -> [N,Cout,Ho,Wo]."""
    N, C, H, W = x.shape
    Cout = weight.shape[0]
    if compute_dtype is None:
        # bf16 operands hit the MXU's bf16 rate on v5e/v6e/v7x and halve
        # operand HBM/VMEM traffic; accumulation and bias stay f32.
        # Pass jnp.float32 for exact-f32 semantics (tests).
        compute_dtype = jnp.bfloat16
    compute_dtype = jnp.dtype(compute_dtype)

    # torch F.pad(x, (0,1,0,1)): +1 right of W, +1 bottom of H.
    Hp, Wp = H + 1, W + 1
    Ho = (Hp - 3) // 2 + 1
    Wo = (Wp - 3) // 2 + 1
    M = N * Ho * Wo
    K = 9 * C                                  # flattened reduction (kh, kw, c)

    # im2col: pad + NCHW->NHWC + 9 strided taps concatenated on the channel
    # axis.  XLA fuses pad/transpose/slice/concat into one fusion, so the
    # wrapper makes a single extra HBM pass writing the [M, 9C] matrix.
    # TODO(synk): fuse the im2col fully into the kernel (pl.ANY xp ref +
    # manual strip DMAs) to drop that remaining pass as well.
    xc = x.astype(compute_dtype)
    xp = jnp.transpose(jnp.pad(xc, ((0, 0), (0, 0), (0, 1), (0, 1))),
                       (0, 2, 3, 1))                                   # [N,Hp,Wp,C]
    cols = jnp.concatenate(
        [xp[:, kh:kh + 2 * Ho - 1:2, kw:kw + 2 * Wo - 1:2, :]
         for kh in range(3) for kw in range(3)], axis=-1)              # [N,Ho,Wo,9C]
    taps = cols.reshape(M, K)

    # Weights -> [Nj, 9C, tn]: lane-dense, Cout padded to a multiple of 128,
    # kept fully VMEM-resident (constant-index BlockSpec => one DMA total).
    Cout_p = -(-Cout // _LANES) * _LANES
    tn = 256 if Cout_p % 256 == 0 else _LANES
    Nj = Cout_p // tn
    wmat = jnp.transpose(weight, (2, 3, 1, 0)).reshape(K, Cout)
    wmat = jnp.pad(wmat, ((0, 0), (0, Cout_p - Cout))).astype(compute_dtype)
    w3 = jnp.transpose(wmat.reshape(K, Nj, tn), (1, 0, 2))             # [Nj,K,tn]
    b2 = jnp.pad(bias, (0, Cout_p - Cout)).reshape(1, Cout_p).astype(jnp.float32)

    out_dtype = x.dtype
    csize = compute_dtype.itemsize
    osize = jnp.dtype(out_dtype).itemsize

    # --- M tile selection --------------------------------------------------
    tm = min(tm, M)
    if tm < M:
        tm = max(8, (tm // 8) * 8)             # keep sublane alignment

    def _vmem(t):  # double-buffered activation/output + resident weights
        return (2 * t * K * csize + 2 * K * Cout_p * csize
                + 2 * t * tn * osize + 2 * tn * 4)

    while tm > 8 and _vmem(tm) > _VMEM_BUDGET:
        tm = max(8, (tm // 2 // 8) * 8)

    # v7x: keep a "parallel" grid axis of extent >= 2 so both TensorCores run.
    if Nj < 2 and pl.cdiv(M, tm) < 2:
        tm_half = max(8, ((M // 2 + 7) // 8) * 8)
        if tm_half < M:
            tm = tm_half

    grid = (pl.cdiv(M, tm), Nj)
    cost = pl.CostEstimate(
        flops=2 * M * K * Cout_p,
        transcendentals=0,
        bytes_accessed=int(M * K * csize + K * Cout_p * csize
                           + M * Cout_p * osize))
    precision = (lax.Precision.HIGHEST
                 if compute_dtype == jnp.float32 else None)

    out = pl.pallas_call(
        _make_conv_kernel(precision),
        out_shape=jax.ShapeDtypeStruct((M, Cout_p), out_dtype),
        grid_spec=pltpu.PrefetchScalarGridSpec(
            num_scalar_prefetch=0,
            grid=grid,
            in_specs=[
                pl.BlockSpec((tm, K), lambda i, j: (i, 0)),          # im2col
                pl.BlockSpec((Nj, K, tn), lambda i, j: (0, 0, 0)),   # resident W
                pl.BlockSpec((1, tn), lambda i, j: (0, j)),          # bias
            ],
            out_specs=pl.BlockSpec((tm, tn), lambda i, j: (i, j))),
        compiler_params=pltpu.CompilerParams(
            dimension_semantics=("parallel", "parallel"),
            vmem_limit_bytes=_VMEM_LIMIT),
        cost_estimate=cost,
    )(taps, w3, b2)

    out = out[:, :Cout].reshape(N, Ho, Wo, Cout)
    return jnp.transpose(out, (0, 3, 1, 2))                           # NCHW


def avgpool_downsample(x, *, block_rows=2048):
    """avg_pool2d(kernel_size=2, stride=2) on NCHW input (floors odd H/W)."""
    N, C, H, W = x.shape
    Ho, Wo = H // 2, W // 2
    if H != 2 * Ho:
        x = x[:, :, :2 * Ho, :]                # drop the odd trailing row
    R = N * C * Ho

    # Lane-dense packing: emit g pooled rows per store so the output tile is
    # >= 128 lanes wide (unmasked vst); g must divide R so the reshape stays a
    # free row-major view.
    g = max(1, _LANES // max(Wo, 1))
    g = min(g, max(R, 1))
    while g > 1 and R % g != 0:
        g //= 2
    Rg = R // g
    x2 = x.reshape(Rg, g * 2 * W)              # free row-major reshape

    # Pooling matrix (0.25 folded in, odd-W tail masked), block-diagonal in g.
    i = np.arange(2 * W)
    col = np.where(i < W, i, i - W)
    base = ((col[:, None] // 2) == np.arange(Wo)[None, :]) & (col[:, None] < 2 * Wo)
    base = base.astype(np.float32) * 0.25                              # [2W, Wo]
    P = jnp.asarray(np.kron(np.eye(g, dtype=np.float32), base))        # [g2W, gWo]

    tm = min(block_rows, Rg)
    while tm > 8 and (2 * tm * g * (2 * W + Wo) * 4 + 2 * P.size * 4) > _VMEM_BUDGET:
        tm = max(8, (tm // 2 // 8) * 8)

    out = pl.pallas_call(
        _avgpool_kernel,
        out_shape=jax.ShapeDtypeStruct((Rg, g * Wo), x.dtype),
        grid=(pl.cdiv(Rg, tm),),
        in_specs=[pl.BlockSpec((tm, g * 2 * W), lambda r: (r, 0)),
                  pl.BlockSpec((g * 2 * W, g * Wo), lambda r: (0, 0))],
        out_specs=pl.BlockSpec((tm, g * Wo), lambda r: (r, 0)),
        compiler_params=pltpu.CompilerParams(
            dimension_semantics=("parallel",),
            vmem_limit_bytes=_VMEM_LIMIT),
    )(x2, P)
    return out.reshape(N, C, Ho, Wo)


class Downsample:
    """JAX/Pallas equivalent of the PyTorch Downsample module."""

    def __init__(self, in_channels, with_conv, key):
        self.with_conv = with_conv
        if self.with_conv:
            kw, kb = jax.random.split(key)
            fan_in = in_channels * 3 * 3
            bound = 1.0 / np.sqrt(fan_in)
            self.weight = jax.random.uniform(
                kw, (in_channels, in_channels, 3, 3), jnp.float32, -bound, bound)
            self.bias = jax.random.uniform(
                kb, (in_channels,), jnp.float32, -bound, bound)

    def __call__(self, x):
        if self.with_conv:
            return conv_downsample(x, self.weight, self.bias)
        return avgpool_downsample(x)


# -------------------------------------------------------------- reference ---

def _ref_conv(x, weight, bias):
    xp = jnp.pad(x, ((0, 0), (0, 0), (0, 1), (0, 1)))
    y = lax.conv_general_dilated(
        xp, weight, window_strides=(2, 2), padding='VALID',
        dimension_numbers=('NCHW', 'OIHW', 'NCHW'),
        precision=lax.Precision.HIGHEST)
    return y + bias[None, :, None, None]


def _ref_pool(x):
    N, C, H, W = x.shape
    return x.reshape(N, C, H // 2, 2, W // 2, 2).mean(axis=(3, 5))


# ------------------------------------------------------------------- main ---

if __name__ == "__main__":
    key = jax.random.PRNGKey(0)
    k_x, k_m = jax.random.split(key)
    x = jax.random.normal(k_x, (2, 4, 16, 16), dtype=jnp.float32)

    # --- with_conv=True ---------------------------------------------------
    mod_conv = Downsample(in_channels=4, with_conv=True, key=k_m)

    # exact-f32 escape hatch
    y_f32 = jax.block_until_ready(
        conv_downsample(x, mod_conv.weight, mod_conv.bias,
                        compute_dtype=jnp.float32))
    ref_f32 = _ref_conv(x, mod_conv.weight, mod_conv.bias)
    assert y_f32.shape == (2, 4, 8, 8)
    np.testing.assert_allclose(np.asarray(y_f32), np.asarray(ref_f32),
                               rtol=1e-4, atol=1e-4)

    # default (bf16 operand, f32 accumulate) fast path, checked against an
    # f32 reference computed on bf16-quantized operands.
    y_bf = jax.block_until_ready(mod_conv(x))
    ref_bf = _ref_conv(
        x.astype(jnp.bfloat16).astype(jnp.float32),
        mod_conv.weight.astype(jnp.bfloat16).astype(jnp.float32),
        mod_conv.bias)
    assert y_bf.shape == (2, 4, 8, 8)
    np.testing.assert_allclose(np.asarray(y_bf), np.asarray(ref_bf),
                               rtol=2e-3, atol=2e-3)

    # --- with_conv=False ----------------------------------------------------
    mod_pool = Downsample(in_channels=4, with_conv=False, key=k_m)
    y_pool = jax.block_until_ready(mod_pool(x))
    ref_pool = _ref_pool(x)
    assert y_pool.shape == (2, 4, 8, 8)
    np.testing.assert_allclose(np.asarray(y_pool), np.asarray(ref_pool),
                               rtol=1e-4, atol=1e-4)

    print("KERNEL_OK")
</pallas_src>

<mosaic_0001>
module attributes {stable_mosaic.version = 11 : i64} {
  func.func @kernel(%arg0: i32, %arg1: i32, %arg2: memref<64x36xf32, #tpu.memory_space<vmem>>, %arg3: memref<1x36x128xf32, #tpu.memory_space<vmem>>, %arg4: memref<1x128xf32, #tpu.memory_space<vmem>>, %arg5: memref<64x128xf32, #tpu.memory_space<vmem>>) attributes {dimension_semantics = [#tpu.dimension_semantics<parallel>, #tpu.dimension_semantics<parallel>], iteration_bounds = array<i64: 2, 1>, scalar_prefetch = 0 : i64, scratch_operands = 0 : i64, tpu.core_type = #tpu.core_type<tc>, window_params = [{transform_indices = @transform_0, window_bounds = array<i64: 64, 36>}, {pipeline_mode = #tpu.pipeline_mode<synchronous>, transform_indices = @transform_1, window_bounds = array<i64: 1, 36, 128>}, {transform_indices = @transform_2, window_bounds = array<i64: 1, 128>}, {transform_indices = @transform_3, window_bounds = array<i64: 64, 128>}]} {
    %c0 = arith.constant 0 : index
    %c0_0 = arith.constant 0 : index
    %0 = vector.load %arg2[%c0, %c0_0] : memref<64x36xf32, #tpu.memory_space<vmem>>, vector<64x36xf32>
    %1 = arith.index_cast %arg1 : i32 to index
    %c0_1 = arith.constant 0 : index
    %c0_2 = arith.constant 0 : index
    %2 = vector.load %arg3[%1, %c0_1, %c0_2] : memref<1x36x128xf32, #tpu.memory_space<vmem>>, vector<1x36x128xf32>
    %3 = vector.shape_cast %2 : vector<1x36x128xf32> to vector<36x128xf32>
    %cst = arith.constant dense<0.000000e+00> : vector<64x128xf32>
    %4 = tpu.matmul %0, %3, %cst {dimension_numbers = #tpu.dot_dimension_numbers<[1], [0], [0], [1], [0, 0, 1, 1], [], []>, precision = #tpu.contract_precision<fp32>} : vector<64x36xf32>, vector<36x128xf32>, vector<64x128xf32> -> vector<64x128xf32>
    %c0_3 = arith.constant 0 : index
    %c0_4 = arith.constant 0 : index
    %5 = vector.load %arg4[%c0_3, %c0_4] : memref<1x128xf32, #tpu.memory_space<vmem>>, vector<1x128xf32>
    %6 = vector.broadcast %5 : vector<1x128xf32> to vector<64x128xf32>
    %7 = arith.addf %4, %6 : vector<64x128xf32>
    %c0_5 = arith.constant 0 : index
    %c0_6 = arith.constant 0 : index
    %8 = vector.load %arg5[%c0_5, %c0_6] : memref<64x128xf32, #tpu.memory_space<vmem>>, vector<64x128xf32>
    tpu.vector_store %arg5[%c0_5, %c0_6], %7 {strides = array<i32>} : memref<64x128xf32, #tpu.memory_space<vmem>>, vector<64x128xf32>,
    return
  }
  func.func @transform_0(%arg0: i32, %arg1: i32) -> (i32, i32) {
    %c0_i32 = arith.constant 0 : i32
    %c0_i32_0 = arith.constant 0 : i32
    return %arg0, %c0_i32 : i32, i32
  }
  func.func @transform_1(%arg0: i32, %arg1: i32) -> (i32, i32, i32) {
    %c0_i32 = arith.constant 0 : i32
    %c0_i32_0 = arith.constant 0 : i32
    %c0_i32_1 = arith.constant 0 : i32
    %c0_i32_2 = arith.constant 0 : i32
    return %c0_i32, %c0_i32_0, %c0_i32_1 : i32, i32, i32
  }
  func.func @transform_2(%arg0: i32, %arg1: i32) -> (i32, i32) {
    %c0_i32 = arith.constant 0 : i32
    %c0_i32_0 = arith.constant 0 : i32
    return %c0_i32, %arg1 : i32, i32
  }
  func.func @transform_3(%arg0: i32, %arg1: i32) -> (i32, i32) {
    %c0_i32 = arith.constant 0 : i32
    return %arg0, %arg1 : i32, i32
  }
}

</mosaic_0001>

<llo_original>
// kernel: tpu_custom_call.1
$region0: #{tpu_custom_call.1}
  #allocation0 [shape = 'u32[]', space=smem, size = 0x4, offset = 0x4, fixed_abs, tag = 'smem constant byte address 0x4 - core index']
  #allocation1 [shape = 'u32[72,128]{1,0:T(1,128)}', space=vmem, size = 0x9000, scoped, tag = 'internal scratch']
  %s0 = inlined_call_operand.vmem [shape: f32[128,36], index: 0, kind: input, shape index: {}]
  %s1 = inlined_call_operand.vmem [shape: f32[1,36,128], index: 1, kind: input, shape index: {}]
  %s2 = inlined_call_operand.vmem [shape: f32[1,128], index: 2, kind: input, shape index: {}]
  %s3 = inlined_call_operand.hbm [shape: f32[128,128], index: 3, kind: output, shape index: {}]
  %s4 = sld [smem:[#allocation0]]
  $region45: #{tpu_custom_call.1} parent=0
    _
  %s6 = ssub.s32 1, %s4
  %s7 = scalar_select 0, %s6, %s4
  $region1: #{tpu_custom_call.1} parent=0
    #allocation2 [shape = 'u8[65536]{0}', space=vmem, size = 0x10000, scoped, tag = 'output window, operand 0']
    #allocation3 [shape = 's32[2]{0}', space=sflag, size = 0x8, scoped, tag = 'scoped memory for tpu_custom_call.1']
    %8 = vsyncpa [#allocation3], 0
    %s9 = scalar_lea.sflag [#allocation3], 1
    %10 = vsyncpa %s9, 0
    loop: start=0, step=1, limit=4
    $region2: #{tpu_custom_call.1} parent=1 // loop_pre_header
      _
    $region3: #{tpu_custom_call.1} parent=1 // loop_header
      %s12 = sphi 0, %s16
      %p13 = scmp.ge.s32.totalorder %s12, 4
      %s19 = sphi 0, %s31
      %s20 = sphi 0, %s27
      %s21 = sphi 0, %s19
      %s22 = sphi 0, %s20
      %s23 = sphi 0, %s21
      %s24 = sphi 0, %s22
      %s34 = sphi 0, %s36
      %s37 = sphi 0, %s34
      %s38 = sphi 0, %s37
      %s54 = sphi 0, %s38
      %s58 = sphi 0, %s58
      %s60 = sphi 0, %s58
      %s61 = sphi 0, %s60
      %s75 = sphi 0, %s61
      %s81 = sphi 0, %s83
      %s84 = sphi 0, %s81
      %s85 = sphi 0, %s84
      %s101 = sphi 0, %s85
      %s109 = sphi 0, %s111
      %s112 = sphi 0, %s109
      %s113 = sphi 0, %s112
      %s129 = sphi 0, %s113
    $region4: #{tpu_custom_call.1} parent=1 // loop_header_branch
      %15 = sbr.rel (%p13) target = $region8
    $region5: #{tpu_custom_call.1} parent=1 // loop_body
      %s17 = ssub.s32 %s12, 1
      %s18 = ssub.s32 %s12, 2
      %s25 = sadd.s32 1, %s20
      %p26 = scmp.ge.s32.totalorder %s25, 1
      %s27 = scalar_select %p26, 0, %s25
      %s28 = sadd.s32 1, %s19
      %s29 = scalar_select %p26, %s28, %s19
      %p30 = scmp.ge.s32.totalorder %s29, 2
      %s31 = scalar_select %p30, 0, %s29
      %s32 = ssub.s32 %s19, %s31
      %p33 = scmp.eq.s32.totalorder %s32, 0
      %s35 = sadd.s32 %s34, 1
      %s36 = scalar_select %p33, %s34, %s35
      %p39 = pneg %p33
      %p40 = scmp.eq.s32.totalorder %s12, 1
      %p41 = por %p39, %p40
      %p42 = scmp.ne.s32.totalorder %s34, %s37
      %p43 = scmp.eq.s32.totalorder %s12, 0
      %p44 = por %p42, %p43
      %p45 = scmp.ne.s32.totalorder %s34, %s37
      %p46 = scmp.eq.s32.totalorder %s17, 1
      %p47 = por %p45, %p46
      %p48 = scmp.ne.s32.totalorder %s37, %s38
      %p49 = scmp.eq.s32.totalorder %s17, 0
      %p50 = por %p48, %p49
      %p51 = scmp.ne.s32.totalorder %s37, %s38
      %p52 = scmp.eq.s32.totalorder %s18, 1
      %p53 = por %p51, %p52
      %p55 = scmp.ne.s32.totalorder %s38, %s54
      %p56 = scmp.eq.s32.totalorder %s18, 0
      %p57 = por %p55, %p56
      %s59 = sadd.s32 %s58, 1
      %p62 = scmp.eq.s32.totalorder %s12, 1
      %p63 = scmp.ne.s32.totalorder %s58, %s60
      %p64 = scmp.eq.s32.totalorder %s12, 0
      %p65 = por %p63, %p64
      %p66 = scmp.ne.s32.totalorder %s58, %s60
      %p67 = scmp.eq.s32.totalorder %s17, 1
      %p68 = por %p66, %p67
      %p69 = scmp.ne.s32.totalorder %s60, %s61
      %p70 = scmp.eq.s32.totalorder %s17, 0
      %p71 = por %p69, %p70
      %p72 = scmp.ne.s32.totalorder %s60, %s61
      %p73 = scmp.eq.s32.totalorder %s18, 1
      %p74 = por %p72, %p73
      %p76 = scmp.ne.s32.totalorder %s61, %s75
      %p77 = scmp.eq.s32.totalorder %s18, 0
      %p78 = por %p76, %p77
      %s79 = ssub.s32 %s20, %s27
      %p80 = scmp.eq.s32.totalorder %s79, 0
      %s82 = sadd.s32 %s81, 1
      %s83 = scalar_select %p80, %s81, %s82
      %p86 = pneg %p80
      %p87 = scmp.eq.s32.totalorder %s12, 1
      %p88 = por %p86, %p87
      %p89 = scmp.ne.s32.totalorder %s81, %s84
      %p90 = scmp.eq.s32.totalorder %s12, 0
      %p91 = por %p89, %p90
      %p92 = scmp.ne.s32.totalorder %s81, %s84
      %p93 = scmp.eq.s32.totalorder %s17, 1
      %p94 = por %p92, %p93
      %p95 = scmp.ne.s32.totalorder %s84, %s85
      %p96 = scmp.eq.s32.totalorder %s17, 0
      %p97 = por %p95, %p96
      %p98 = scmp.ne.s32.totalorder %s84, %s85
      %p99 = scmp.eq.s32.totalorder %s18, 1
      %p100 = por %p98, %p99
      %p102 = scmp.ne.s32.totalorder %s85, %s101
      %p103 = scmp.eq.s32.totalorder %s18, 0
      %p104 = por %p102, %p103
      %s105 = ssub.s32 %s19, %s31
      %s106 = ssub.s32 %s20, %s27
      %s107 = sor.u32 %s105, %s106
      %p108 = scmp.eq.s32.totalorder %s107, 0
      %s110 = sadd.s32 %s109, 1
      %s111 = scalar_select %p108, %s109, %s110
      %p114 = pneg %p108
      %p115 = scmp.eq.s32.totalorder %s12, 1
      %p116 = por %p114, %p115
      %p117 = scmp.ne.s32.totalorder %s109, %s112
      %p118 = scmp.eq.s32.totalorder %s12, 0
      %p119 = por %p117, %p118
      %p120 = scmp.ne.s32.totalorder %s109, %s112
      %p121 = scmp.eq.s32.totalorder %s17, 1
      %p122 = por %p120, %p121
      %p123 = scmp.ne.s32.totalorder %s112, %s113
      %p124 = scmp.eq.s32.totalorder %s17, 0
      %p125 = por %p123, %p124
      %p126 = scmp.ne.s32.totalorder %s112, %s113
      %p127 = scmp.eq.s32.totalorder %s18, 1
      %p128 = por %p126, %p127
      %p130 = scmp.ne.s32.totalorder %s113, %s129
      %p131 = scmp.eq.s32.totalorder %s18, 0
      %p132 = por %p130, %p131
      %p133 = scmp.le.s32.totalorder 1, %s12
      %p134 = scmp.lt.s32.totalorder %s12, 3
      %p135 = pnand %p133, %p134
      %p136 = pneg %p135
      // Predicated region
      $region9: #{tpu_custom_call.1} parent=5 // pred_check
        _
      $region10: #{tpu_custom_call.1} parent=5 // pred_check_branch
        %138 = sbr.rel (%p135) target = $region12
      $region11: #{tpu_custom_call.1} parent=5 // pred_region
        %s139 = ssub.s32 %s12, 1
        // Predicated region
        $region13: #{tpu_custom_call.1} parent=11 // pred_check
          %p140 = pneg %p71
        $region14: #{tpu_custom_call.1} parent=11 // pred_check_branch
          %142 = sbr.rel (%p140) target = $region16
        $region15: #{tpu_custom_call.1} parent=11 // pred_region
          _
        $region16: #{tpu_custom_call.1} parent=11 // pred_fallthru
          _
        // Predicated region
        $region17: #{tpu_custom_call.1} parent=11 // pred_check
          %p143 = pneg %p97
        $region18: #{tpu_custom_call.1} parent=11 // pred_check_branch
          %145 = sbr.rel (%p143) target = $region20
        $region19: #{tpu_custom_call.1} parent=11 // pred_region
          %p146 = scmp.lt.s32.totalorder %s22, 0
          %s147 = scalar_select %p146, %s22, 0
          %s148 = scalar_lea.vmem %s2, %s147
        $region20: #{tpu_custom_call.1} parent=11 // pred_fallthru
          _
      $region12: #{tpu_custom_call.1} parent=5 // pred_fallthru
        _
      %p149 = scmp.lt.s32.totalorder %s12, 2
      // Predicated region
      $region21: #{tpu_custom_call.1} parent=5 // pred_check
        %p150 = pneg %p149
      $region22: #{tpu_custom_call.1} parent=5 // pred_check_branch
        %152 = sbr.rel (%p150) target = $region24
      $region23: #{tpu_custom_call.1} parent=5 // pred_region
        // Predicated region
        $region25: #{tpu_custom_call.1} parent=23 // pred_check
          %p153 = pneg %p44
        $region26: #{tpu_custom_call.1} parent=23 // pred_check_branch
          %155 = sbr.rel (%p153) target = $region28
        $region27: #{tpu_custom_call.1} parent=23 // pred_region
          %s156 = smul.u32 8, %s19
          %p157 = scmp.lt.s32.totalorder %s156, 15
          %s158 = scalar_select %p157, %s156, 15
          %s159 = smul.addr %s158, 8
          %s160 = scalar_lea.vmem %s0, %s159
          %s161 = smul.u32 8, %s19
        $region28: #{tpu_custom_call.1} parent=23 // pred_fallthru
          _
      $region24: #{tpu_custom_call.1} parent=5 // pred_fallthru
        _
      %p162 = scmp.le.s32.totalorder 1, %s12
      %p163 = scmp.lt.s32.totalorder %s12, 3
      %p164 = pnand %p162, %p163
      %p165 = pneg %p164
      // Predicated region
      $region29: #{tpu_custom_call.1} parent=5 // pred_check
        _
      $region30: #{tpu_custom_call.1} parent=5 // pred_check_branch
        %167 = sbr.rel (%p164) target = $region32
      $region31: #{tpu_custom_call.1} parent=5 // pred_region
        %s168 = ssub.s32 %s12, 1
        %s169 = smul.u32 8, %s21
        %p170 = scmp.lt.s32.totalorder %s169, 15
        %s171 = scalar_select %p170, %s169, 15
        %s172 = smul.addr %s171, 8
        %s173 = scalar_lea.vmem %s0, %s172
        %p174 = pneg %p50
        %p175 = pneg %p47
        %p176 = pneg %p71
        %p177 = pneg %p68
        %p178 = scmp.lt.s32.totalorder %s22, 0
        %s179 = scalar_select %p178, %s22, 0
        %s180 = scalar_lea.vmem %s2, %s179
        %p181 = pneg %p97
        %p182 = pneg %p94
        %p183 = pneg %p125
        %p184 = pneg %p122
        %s185 = sand.u32 %s112, 1
        %s186 = scalar_lea.sflag [#allocation3], %s185
        %s187 = sand.u32 %s112, 1
        %s188 = smul.addr %s187, 64
        %s189 = scalar_lea.vmem [#allocation2], %s188
        %s190 = smul.u32 8, %s21
        %p191 = scmp.lt.s32.totalorder %s190, 15
        %s192 = scalar_select %p191, %s190, 15
        %s193 = smul.addr %s192, 8
        %s194 = scalar_lea.vmem %s0, %s193
        %s195 = smul.u32 8, %s21
        %p196 = scmp.lt.s32.totalorder %s22, 0
        %s197 = scalar_select %p196, %s22, 0
        %s198 = scalar_lea.vmem %s2, %s197
        %s199 = smul.u32 8, %s21
        %v200 = vld [vmem:[%s194] sm:$0xff]
        %v201 = vld [vmem:[%s194 + $0x8] sm:$0xff]
        %v202 = vld [vmem:[%s194 + $0x10] sm:$0xff]
        %v203 = vld [vmem:[%s194 + $0x18] sm:$0xff]
        %v204 = vld [vmem:[%s194 + $0x20] sm:$0xff]
        %v205 = vld [vmem:[%s194 + $0x28] sm:$0xff]
        %v206 = vld [vmem:[%s194 + $0x30] sm:$0xff]
        %v207 = vld [vmem:[%s194 + $0x38] sm:$0xff]
        %s208 = smul.u32 %s22, 40
        %s209 = scalar_lea.vmem %s1, %s208
        %v210 = vld [vmem:[%s209] sm:$0xff]
        %v211 = vld [vmem:[%s209 + $0x8] sm:$0xff]
        %v212 = vld [vmem:[%s209 + $0x10] sm:$0xff]
        %v213 = vld [vmem:[%s209 + $0x18] sm:$0xff]
        %v214 = vld [vmem:[%s209 + $0x20] sm:$0xf]
        %v215 = vld [vmem:[%s198] sm:$0x1]
        %v217 = vperm.slane %v215, 0
        %vm219 = vcmask 293888
        %v221 = vsel %vm219, %v200, 0
        %v224 = vsel %vm219, %v201, 0
        %v227 = vsel %vm219, %v202, 0
        %v230 = vsel %vm219, %v203, 0
        %v233 = vsel %vm219, %v204, 0
        %v236 = vsel %vm219, %v205, 0
        %v239 = vsel %vm219, %v206, 0
        %v242 = vsel %vm219, %v207, 0
        %vm244 = vcmask 1043456
        %v246 = vsel %vm244, %v214, 0
        %248 = vmatpush.msra.mxu0 0.0
        %249 = vmatpush.msra.mxu0 0.0
        %250 = vmatpush.msra.mxu0 0.0
        %251 = vmatpush.msra.mxu0 0.0
        %252 = vmatpush.msra.mxu0 0.0
        %253 = vmatpush.msra.mxu0 0.0
        %254 = vmatpush.msra.mxu0 0.0
        %255 = vmatpush.msra.mxu0 0.0
        %256 = vmatpush.msra.mxu0 0.0
        %257 = vmatpush.msra.mxu0 0.0
        %258 = vmatpush.msra.mxu0 0.0
        %v259 = vand.u32 %v246, 4294901760
        %260 = vmatpush.msra.mxu0 %v259
        %v261 = vand.u32 %v213, 4294901760
        %262 = vmatpush.msra.mxu0 %v261
        %v263 = vand.u32 %v212, 4294901760
        %264 = vmatpush.msra.mxu0 %v263
        %v265 = vand.u32 %v211, 4294901760
        %266 = vmatpush.msra.mxu0 %v265
        %v267 = vand.u32 %v210, 4294901760
        %268 = vmatpush.msra.mxu0 %v267
        %v269 = vand.u32 %v221, 4294901760
        %v270 = vsub.f32 %v221, %v269
        %v271 = vand.u32 %v270, 4294901760
        %v272 = vsub.f32 %v270, %v271
        %v273 = vand.u32 %v272, 4294901760
        %274 = vmatmul.f32.gmra.mxu0 %v273
        %v275 = vpop.f32.mrf.mxu0
        %v276 = vadd.f32 %v217, %v275
        %v277 = vand.u32 %v224, 4294901760
        %v278 = vsub.f32 %v224, %v277
        %v279 = vand.u32 %v278, 4294901760
        %v280 = vsub.f32 %v278, %v279
        %v281 = vand.u32 %v280, 4294901760
        %282 = vmatmul.f32.gmra.mxu0 %v281
        %v283 = vpop.f32.mrf.mxu0
        %v284 = vadd.f32 %v217, %v283
        %v285 = vand.u32 %v227, 4294901760
        %v286 = vsub.f32 %v227, %v285
        %v287 = vand.u32 %v286, 4294901760
        %v288 = vsub.f32 %v286, %v287
        %v289 = vand.u32 %v288, 4294901760
        %290 = vmatmul.f32.gmra.mxu0 %v289
        %v291 = vpop.f32.mrf.mxu0
        %v292 = vadd.f32 %v217, %v291
        %v293 = vand.u32 %v230, 4294901760
        %v294 = vsub.f32 %v230, %v293
        %v295 = vand.u32 %v294, 4294901760
        %v296 = vsub.f32 %v294, %v295
        %v297 = vand.u32 %v296, 4294901760
        %298 = vmatmul.f32.gmra.mxu0 %v297
        %v299 = vpop.f32.mrf.mxu0
        %v300 = vadd.f32 %v217, %v299
        %v301 = vand.u32 %v233, 4294901760
        %v302 = vsub.f32 %v233, %v301
        %v303 = vand.u32 %v302, 4294901760
        %v304 = vsub.f32 %v302, %v303
        %v305 = vand.u32 %v304, 4294901760
        %306 = vmatmul.f32.gmra.mxu0 %v305
        %v307 = vpop.f32.mrf.mxu0
        %v308 = vadd.f32 %v217, %v307
        %v309 = vand.u32 %v236, 4294901760
        %v310 = vsub.f32 %v236, %v309
        %v311 = vand.u32 %v310, 4294901760
        %v312 = vsub.f32 %v310, %v311
        %v313 = vand.u32 %v312, 4294901760
        %314 = vmatmul.f32.gmra.mxu0 %v313
        %v315 = vpop.f32.mrf.mxu0
        %v316 = vadd.f32 %v217, %v315
        %v317 = vand.u32 %v239, 4294901760
        %v318 = vsub.f32 %v239, %v317
        %v319 = vand.u32 %v318, 4294901760
        %v320 = vsub.f32 %v318, %v319
        %v321 = vand.u32 %v320, 4294901760
        %322 = vmatmul.f32.gmra.mxu0 %v321
        %v323 = vpop.f32.mrf.mxu0
        %v324 = vadd.f32 %v217, %v323
        %v325 = vand.u32 %v242, 4294901760
        %v326 = vsub.f32 %v242, %v325
        %v327 = vand.u32 %v326, 4294901760
        %v328 = vsub.f32 %v326, %v327
        %v329 = vand.u32 %v328, 4294901760
        %330 = vmatmul.f32.gmra.mxu0 %v329
        %v331 = vpop.f32.mrf.mxu0
        %v332 = vadd.f32 %v217, %v331
        %333 = vdwg.mxu0
        %334 = vmatpush.msra.mxu0 0.0
        %335 = vmatpush.msra.mxu0 0.0
        %336 = vmatpush.msra.mxu0 0.0
        %337 = vmatpush.msra.mxu0 0.0
        %338 = vmatpush.msra.mxu0 0.0
        %339 = vmatpush.msra.mxu0 0.0
        %340 = vmatpush.msra.mxu0 0.0
        %341 = vmatpush.msra.mxu0 0.0
        %342 = vmatpush.msra.mxu0 0.0
        %343 = vmatpush.msra.mxu0 0.0
        %344 = vmatpush.msra.mxu0 0.0
        %v345 = vand.u32 %v246, 4294901760
        %v346 = vsub.f32 %v246, %v345
        %v347 = vand.u32 %v346, 4294901760
        %v348 = vsub.f32 %v346, %v347
        %v349 = vand.u32 %v348, 4294901760
        %350 = vmatpush.msra.mxu0 %v349
        %v351 = vand.u32 %v213, 4294901760
        %v352 = vsub.f32 %v213, %v351
        %v353 = vand.u32 %v352, 4294901760
        %v354 = vsub.f32 %v352, %v353
        %v355 = vand.u32 %v354, 4294901760
        %356 = vmatpush.msra.mxu0 %v355
        %v357 = vand.u32 %v212, 4294901760
        %v358 = vsub.f32 %v212, %v357
        %v359 = vand.u32 %v358, 4294901760
        %v360 = vsub.f32 %v358, %v359
        %v361 = vand.u32 %v360, 4294901760
        %362 = vmatpush.msra.mxu0 %v361
        %v363 = vand.u32 %v211, 4294901760
        %v364 = vsub.f32 %v211, %v363
        %v365 = vand.u32 %v364, 4294901760
        %v366 = vsub.f32 %v364, %v365
        %v367 = vand.u32 %v366, 4294901760
        %368 = vmatpush.msra.mxu0 %v367
        %v369 = vand.u32 %v210, 4294901760
        %v370 = vsub.f32 %v210, %v369
        %v371 = vand.u32 %v370, 4294901760
        %v372 = vsub.f32 %v370, %v371
        %v373 = vand.u32 %v372, 4294901760
        %374 = vmatpush.msra.mxu0 %v373
        %v375 = vand.u32 %v221, 4294901760
        %376 = vmatmul.f32.gmra.mxu0 %v375
        %v377 = vpop.f32.mrf.mxu0
        %v378 = vadd.f32 %v276, %v377
        %v379 = vand.u32 %v224, 4294901760
        %380 = vmatmul.f32.gmra.mxu0 %v379
        %v381 = vpop.f32.mrf.mxu0
        %v382 = vadd.f32 %v284, %v381
        %v383 = vand.u32 %v227, 4294901760
        %384 = vmatmul.f32.gmra.mxu0 %v383
        %v385 = vpop.f32.mrf.mxu0
        %v386 = vadd.f32 %v292, %v385
        %v387 = vand.u32 %v230, 4294901760
        %388 = vmatmul.f32.gmra.mxu0 %v387
        %v389 = vpop.f32.mrf.mxu0
        %v390 = vadd.f32 %v300, %v389
        %v391 = vand.u32 %v233, 4294901760
        %392 = vmatmul.f32.gmra.mxu0 %v391
        %v393 = vpop.f32.mrf.mxu0
        %v394 = vadd.f32 %v308, %v393
        %v395 = vand.u32 %v236, 4294901760
        %396 = vmatmul.f32.gmra.mxu0 %v395
        %v397 = vpop.f32.mrf.mxu0
        %v398 = vadd.f32 %v316, %v397
        %v399 = vand.u32 %v239, 4294901760
        %400 = vmatmul.f32.gmra.mxu0 %v399
        %v401 = vpop.f32.mrf.mxu0
        %v402 = vadd.f32 %v324, %v401
        %v403 = vand.u32 %v242, 4294901760
        %404 = vmatmul.f32.gmra.mxu0 %v403
        %v405 = vpop.f32.mrf.mxu0
        %v406 = vadd.f32 %v332, %v405
        %407 = vdwg.mxu0
        %408 = vmatpush.msra.mxu0 0.0
        %409 = vmatpush.msra.mxu0 0.0
        %410 = vmatpush.msra.mxu0 0.0
        %411 = vmatpush.msra.mxu0 0.0
        %412 = vmatpush.msra.mxu0 0.0
        %413 = vmatpush.msra.mxu0 0.0
        %414 = vmatpush.msra.mxu0 0.0
        %415 = vmatpush.msra.mxu0 0.0
        %416 = vmatpush.msra.mxu0 0.0
        %417 = vmatpush.msra.mxu0 0.0
        %418 = vmatpush.msra.mxu0 0.0
        %v419 = vand.u32 %v246, 4294901760
        %v420 = vsub.f32 %v246, %v419
        %421 = vmatpush.msra.mxu0 %v420
        %v422 = vand.u32 %v213, 4294901760
        %v423 = vsub.f32 %v213, %v422
        %424 = vmatpush.msra.mxu0 %v423
        %v425 = vand.u32 %v212, 4294901760
        %v426 = vsub.f32 %v212, %v425
        %427 = vmatpush.msra.mxu0 %v426
        %v428 = vand.u32 %v211, 4294901760
        %v429 = vsub.f32 %v211, %v428
        %430 = vmatpush.msra.mxu0 %v429
        %v431 = vand.u32 %v210, 4294901760
        %v432 = vsub.f32 %v210, %v431
        %433 = vmatpush.msra.mxu0 %v432
        %v434 = vand.u32 %v221, 4294901760
        %v435 = vsub.f32 %v221, %v434
        %436 = vmatmul.f32.gmra.mxu0 %v435
        %v437 = vpop.f32.mrf.mxu0
        %v438 = vadd.f32 %v378, %v437
        %v439 = vand.u32 %v224, 4294901760
        %v440 = vsub.f32 %v224, %v439
        %441 = vmatmul.f32.gmra.mxu0 %v440
        %v442 = vpop.f32.mrf.mxu0
        %v443 = vadd.f32 %v382, %v442
        %v444 = vand.u32 %v227, 4294901760
        %v445 = vsub.f32 %v227, %v444
        %446 = vmatmul.f32.gmra.mxu0 %v445
        %v447 = vpop.f32.mrf.mxu0
        %v448 = vadd.f32 %v386, %v447
        %v449 = vand.u32 %v230, 4294901760
        %v450 = vsub.f32 %v230, %v449
        %451 = vmatmul.f32.gmra.mxu0 %v450
        %v452 = vpop.f32.mrf.mxu0
        %v453 = vadd.f32 %v390, %v452
        %v454 = vand.u32 %v233, 4294901760
        %v455 = vsub.f32 %v233, %v454
        %456 = vmatmul.f32.gmra.mxu0 %v455
        %v457 = vpop.f32.mrf.mxu0
        %v458 = vadd.f32 %v394, %v457
        %v459 = vand.u32 %v236, 4294901760
        %v460 = vsub.f32 %v236, %v459
        %461 = vmatmul.f32.gmra.mxu0 %v460
        %v462 = vpop.f32.mrf.mxu0
        %v463 = vadd.f32 %v398, %v462
        %v464 = vand.u32 %v239, 4294901760
        %v465 = vsub.f32 %v239, %v464
        %466 = vmatmul.f32.gmra.mxu0 %v465
        %v467 = vpop.f32.mrf.mxu0
        %v468 = vadd.f32 %v402, %v467
        %v469 = vand.u32 %v242, 4294901760
        %v470 = vsub.f32 %v242, %v469
        %471 = vmatmul.f32.gmra.mxu0 %v470
        %v472 = vpop.f32.mrf.mxu0
        %v473 = vadd.f32 %v406, %v472
        %474 = vdwg.mxu0
        %475 = vmatpush.msra.mxu0 0.0
        %476 = vmatpush.msra.mxu0 0.0
        %477 = vmatpush.msra.mxu0 0.0
        %478 = vmatpush.msra.mxu0 0.0
        %479 = vmatpush.msra.mxu0 0.0
        %480 = vmatpush.msra.mxu0 0.0
        %481 = vmatpush.msra.mxu0 0.0
        %482 = vmatpush.msra.mxu0 0.0
        %483 = vmatpush.msra.mxu0 0.0
        %484 = vmatpush.msra.mxu0 0.0
        %485 = vmatpush.msra.mxu0 0.0
        %v486 = vand.u32 %v246, 4294901760
        %487 = vmatpush.msra.mxu0 %v486
        %v488 = vand.u32 %v213, 4294901760
        %489 = vmatpush.msra.mxu0 %v488
        %v490 = vand.u32 %v212, 4294901760
        %491 = vmatpush.msra.mxu0 %v490
        %v492 = vand.u32 %v211, 4294901760
        %493 = vmatpush.msra.mxu0 %v492
        %v494 = vand.u32 %v210, 4294901760
        %495 = vmatpush.msra.mxu0 %v494
        %v496 = vand.u32 %v221, 4294901760
        %v497 = vsub.f32 %v221, %v496
        %v498 = vand.u32 %v497, 4294901760
        %499 = vmatmul.f32.gmra.mxu0 %v498
        %v500 = vpop.f32.mrf.mxu0
        %v501 = vadd.f32 %v438, %v500
        %v502 = vand.u32 %v224, 4294901760
        %v503 = vsub.f32 %v224, %v502
        %v504 = vand.u32 %v503, 4294901760
        %505 = vmatmul.f32.gmra.mxu0 %v504
        %v506 = vpop.f32.mrf.mxu0
        %v507 = vadd.f32 %v443, %v506
        %v508 = vand.u32 %v227, 4294901760
        %v509 = vsub.f32 %v227, %v508
        %v510 = vand.u32 %v509, 4294901760
        %511 = vmatmul.f32.gmra.mxu0 %v510
        %v512 = vpop.f32.mrf.mxu0
        %v513 = vadd.f32 %v448, %v512
        %v514 = vand.u32 %v230, 4294901760
        %v515 = vsub.f32 %v230, %v514
        %v516 = vand.u32 %v515, 4294901760
        %517 = vmatmul.f32.gmra.mxu0 %v516
        %v518 = vpop.f32.mrf.mxu0
        %v519 = vadd.f32 %v453, %v518
        %v520 = vand.u32 %v233, 4294901760
        %v521 = vsub.f32 %v233, %v520
        %v522 = vand.u32 %v521, 4294901760
        %523 = vmatmul.f32.gmra.mxu0 %v522
        %v524 = vpop.f32.mrf.mxu0
        %v525 = vadd.f32 %v458, %v524
        %v526 = vand.u32 %v236, 4294901760
        %v527 = vsub.f32 %v236, %v526
        %v528 = vand.u32 %v527, 4294901760
        %529 = vmatmul.f32.gmra.mxu0 %v528
        %v530 = vpop.f32.mrf.mxu0
        %v531 = vadd.f32 %v463, %v530
        %v532 = vand.u32 %v239, 4294901760
        %v533 = vsub.f32 %v239, %v532
        %v534 = vand.u32 %v533, 4294901760
        %535 = vmatmul.f32.gmra.mxu0 %v534
        %v536 = vpop.f32.mrf.mxu0
        %v537 = vadd.f32 %v468, %v536
        %v538 = vand.u32 %v242, 4294901760
        %v539 = vsub.f32 %v242, %v538
        %v540 = vand.u32 %v539, 4294901760
        %541 = vmatmul.f32.gmra.mxu0 %v540
        %v542 = vpop.f32.mrf.mxu0
        %v543 = vadd.f32 %v473, %v542
        %544 = vdwg.mxu0
        %545 = vmatpush.msra.mxu0 0.0
        %546 = vmatpush.msra.mxu0 0.0
        %547 = vmatpush.msra.mxu0 0.0
        %548 = vmatpush.msra.mxu0 0.0
        %549 = vmatpush.msra.mxu0 0.0
        %550 = vmatpush.msra.mxu0 0.0
        %551 = vmatpush.msra.mxu0 0.0
        %552 = vmatpush.msra.mxu0 0.0
        %553 = vmatpush.msra.mxu0 0.0
        %554 = vmatpush.msra.mxu0 0.0
        %555 = vmatpush.msra.mxu0 0.0
        %v556 = vand.u32 %v246, 4294901760
        %v557 = vsub.f32 %v246, %v556
        %v558 = vand.u32 %v557, 4294901760
        %559 = vmatpush.msra.mxu0 %v558
        %v560 = vand.u32 %v213, 4294901760
        %v561 = vsub.f32 %v213, %v560
        %v562 = vand.u32 %v561, 4294901760
        %563 = vmatpush.msra.mxu0 %v562
        %v564 = vand.u32 %v212, 4294901760
        %v565 = vsub.f32 %v212, %v564
        %v566 = vand.u32 %v565, 4294901760
        %567 = vmatpush.msra.mxu0 %v566
        %v568 = vand.u32 %v211, 4294901760
        %v569 = vsub.f32 %v211, %v568
        %v570 = vand.u32 %v569, 4294901760
        %571 = vmatpush.msra.mxu0 %v570
        %v572 = vand.u32 %v210, 4294901760
        %v573 = vsub.f32 %v210, %v572
        %v574 = vand.u32 %v573, 4294901760
        %575 = vmatpush.msra.mxu0 %v574
        %v576 = vand.u32 %v221, 4294901760
        %577 = vmatmul.f32.gmra.mxu0 %v576
        %v578 = vpop.f32.mrf.mxu0
        %v579 = vadd.f32 %v501, %v578
        %v580 = vand.u32 %v224, 4294901760
        %581 = vmatmul.f32.gmra.mxu0 %v580
        %v582 = vpop.f32.mrf.mxu0
        %v583 = vadd.f32 %v507, %v582
        %v584 = vand.u32 %v227, 4294901760
        %585 = vmatmul.f32.gmra.mxu0 %v584
        %v586 = vpop.f32.mrf.mxu0
        %v587 = vadd.f32 %v513, %v586
        %v588 = vand.u32 %v230, 4294901760
        %589 = vmatmul.f32.gmra.mxu0 %v588
        %v590 = vpop.f32.mrf.mxu0
        %v591 = vadd.f32 %v519, %v590
        %v592 = vand.u32 %v233, 4294901760
        %593 = vmatmul.f32.gmra.mxu0 %v592
        %v594 = vpop.f32.mrf.mxu0
        %v595 = vadd.f32 %v525, %v594
        %v596 = vand.u32 %v236, 4294901760
        %597 = vmatmul.f32.gmra.mxu0 %v596
        %v598 = vpop.f32.mrf.mxu0
        %v599 = vadd.f32 %v531, %v598
        %v600 = vand.u32 %v239, 4294901760
        %601 = vmatmul.f32.gmra.mxu0 %v600
        %v602 = vpop.f32.mrf.mxu0
        %v603 = vadd.f32 %v537, %v602
        %v604 = vand.u32 %v242, 4294901760
        %605 = vmatmul.f32.gmra.mxu0 %v604
        %v606 = vpop.f32.mrf.mxu0
        %v607 = vadd.f32 %v543, %v606
        %608 = vdwg.mxu0
        %609 = vmatpush.msra.mxu0 0.0
        %610 = vmatpush.msra.mxu0 0.0
        %611 = vmatpush.msra.mxu0 0.0
        %612 = vmatpush.msra.mxu0 0.0
        %613 = vmatpush.msra.mxu0 0.0
        %614 = vmatpush.msra.mxu0 0.0
        %615 = vmatpush.msra.mxu0 0.0
        %616 = vmatpush.msra.mxu0 0.0
        %617 = vmatpush.msra.mxu0 0.0
        %618 = vmatpush.msra.mxu0 0.0
        %619 = vmatpush.msra.mxu0 0.0
        %v620 = vand.u32 %v246, 4294901760
        %621 = vmatpush.msra.mxu0 %v620
        %v622 = vand.u32 %v213, 4294901760
        %623 = vmatpush.msra.mxu0 %v622
        %v624 = vand.u32 %v212, 4294901760
        %625 = vmatpush.msra.mxu0 %v624
        %v626 = vand.u32 %v211, 4294901760
        %627 = vmatpush.msra.mxu0 %v626
        %v628 = vand.u32 %v210, 4294901760
        %629 = vmatpush.msra.mxu0 %v628
        %v630 = vand.u32 %v221, 4294901760
        %631 = vmatmul.f32.gmra.mxu0 %v630
        %v632 = vpop.f32.mrf.mxu0
        %v633 = vadd.f32 %v579, %v632
        %v634 = vand.u32 %v224, 4294901760
        %635 = vmatmul.f32.gmra.mxu0 %v634
        %v636 = vpop.f32.mrf.mxu0
        %v637 = vadd.f32 %v583, %v636
        %v638 = vand.u32 %v227, 4294901760
        %639 = vmatmul.f32.gmra.mxu0 %v638
        %v640 = vpop.f32.mrf.mxu0
        %v641 = vadd.f32 %v587, %v640
        %v642 = vand.u32 %v230, 4294901760
        %643 = vmatmul.f32.gmra.mxu0 %v642
        %v644 = vpop.f32.mrf.mxu0
        %v645 = vadd.f32 %v591, %v644
        %v646 = vand.u32 %v233, 4294901760
        %647 = vmatmul.f32.gmra.mxu0 %v646
        %v648 = vpop.f32.mrf.mxu0
        %v649 = vadd.f32 %v595, %v648
        %v650 = vand.u32 %v236, 4294901760
        %651 = vmatmul.f32.gmra.mxu0 %v650
        %v652 = vpop.f32.mrf.mxu0
        %v653 = vadd.f32 %v599, %v652
        %v654 = vand.u32 %v239, 4294901760
        %655 = vmatmul.f32.gmra.mxu0 %v654
        %v656 = vpop.f32.mrf.mxu0
        %v657 = vadd.f32 %v603, %v656
        %v658 = vand.u32 %v242, 4294901760
        %659 = vmatmul.f32.gmra.mxu0 %v658
        %v660 = vpop.f32.mrf.mxu0
        %v661 = vadd.f32 %v607, %v660
        %662 = vdwg.mxu0
        %663 = vst [vmem:[%s189] sm:$0xff] %v633
        %664 = vst [vmem:[%s189 + $0x8] sm:$0xff] %v637
        %665 = vst [vmem:[%s189 + $0x10] sm:$0xff] %v641
        %666 = vst [vmem:[%s189 + $0x18] sm:$0xff] %v645
        %667 = vst [vmem:[%s189 + $0x20] sm:$0xff] %v649
        %668 = vst [vmem:[%s189 + $0x28] sm:$0xff] %v653
        %669 = vst [vmem:[%s189 + $0x30] sm:$0xff] %v657
        %670 = vst [vmem:[%s189 + $0x38] sm:$0xff] %v661
        %s671 = sand.u32 %s112, 1
        %s672 = scalar_lea.sflag [#allocation3], %s671
        %s673 = sand.u32 %s112, 1
        %s674 = smul.addr %s673, 64
        %s675 = scalar_lea.vmem [#allocation2], %s674
        // Predicated region
        $region33: #{tpu_custom_call.1} parent=31 // pred_check
          %p676 = pneg %p122
        $region34: #{tpu_custom_call.1} parent=31 // pred_check_branch
          %678 = sbr.rel (%p676) target = $region36
        $region35: #{tpu_custom_call.1} parent=31 // pred_region
          %s679 = smul.u32 8, %s21
          %681 = vsyncadd %s672, 0
          %s682 = sadd.s32 %s22, %s679
          %s683 = smul.addr %s682, 8
          %s684 = scalar_lea.hbm %s3, %s683
          %s685 = sshll.u32 %s675, 4
          %s686 = int_to_ptr.vmem [resolvable:$true] %s685
          %s687 = sshll.u32 %s684, 4
          %s688 = int_to_ptr.hbm [resolvable:$true] %s687
          %693 = dma.vmem_to_hbm [thread:$0]  %s686, 1024, %s688, %s672, 128, 128, 8
        $region36: #{tpu_custom_call.1} parent=31 // pred_fallthru
          _
      $region32: #{tpu_custom_call.1} parent=5 // pred_fallthru
        _
      %p694 = scmp.le.s32.totalorder 2, %s12
      // Predicated region
      $region37: #{tpu_custom_call.1} parent=5 // pred_check
        %p695 = pneg %p694
      $region38: #{tpu_custom_call.1} parent=5 // pred_check_branch
        %697 = sbr.rel (%p695) target = $region40
      $region39: #{tpu_custom_call.1} parent=5 // pred_region
        %s698 = ssub.s32 %s12, 2
        // Predicated region
        $region41: #{tpu_custom_call.1} parent=39 // pred_check
          %p699 = pneg %p128
        $region42: #{tpu_custom_call.1} parent=39 // pred_check_branch
          %701 = sbr.rel (%p699) target = $region44
        $region43: #{tpu_custom_call.1} parent=39 // pred_region
          %s702 = sand.u32 %s113, 1
          %s703 = scalar_lea.sflag [#allocation3], %s702
          %s704 = sand.u32 %s113, 1
          %s705 = smul.addr %s704, 64
          %s706 = scalar_lea.vmem [#allocation2], %s705
          %708 = dma.done %s703, 1024
        $region44: #{tpu_custom_call.1} parent=39 // pred_fallthru
          _
      $region40: #{tpu_custom_call.1} parent=5 // pred_fallthru
        _
    $region6: #{tpu_custom_call.1} parent=1 // loop_footer
      %s16 = sadd.s32 1, %s12
    $region7: #{tpu_custom_call.1} parent=1 // loop_footer_branch
      %11 = sbr.rel target = $region3
    $region8: #{tpu_custom_call.1} parent=1 // loop_exit
      _
    %709 = vsyncpa [#allocation3], 1
    %s710 = scalar_lea.sflag [#allocation3], 1
    %711 = vsyncpa %s710, 1

</llo_original>
